<compile_context>
chip_gen: v7x
topology: tpu7x:2x2x1
jax: 0.10.0
libtpu: 0.0.40
codegen_flags: <defaults>
</compile_context>

<pallas_src>
import math
import functools

import jax
import jax.numpy as jnp
from jax import lax
from jax.experimental import pallas as pl
from jax.experimental.pallas import tpu as pltpu


def _vmem_limit(bytes_needed):
    # Explicit scoped-VMEM limit with headroom; clamp to v7x's 64 MiB physical.
    return int(min(64 * 1024 * 1024, max(32 * 1024 * 1024, 2 * bytes_needed)))


# ---------------------------------------------------------------------------
# Kernel 1: fused Q/K/V linear projections.
#   grid = (batch, seq_blocks); bf16 MXU operands, f32 accumulate, bf16 store.
# ---------------------------------------------------------------------------
def _qkv_proj_kernel(xq_ref, xk_ref, xv_ref, w_ref, b_ref, q_ref, k_ref, v_ref):
    # x*_ref: (1, block_s, D) f32 ; w_ref: (3, D, D) bf16 ; b_ref: (3, 1, D) f32
    def proj(x_ref, idx, o_ref):
        x = x_ref[0].astype(jnp.bfloat16)            # in-kernel cast (free on VPU)
        y = jnp.dot(x, w_ref[idx], preferred_element_type=jnp.float32) + b_ref[idx]
        o_ref[0] = y.astype(o_ref.dtype)

    proj(xq_ref, 0, q_ref)
    proj(xk_ref, 1, k_ref)
    proj(xv_ref, 2, v_ref)


def _qkv_projection(xq, xk, xv, w_qkv, b_qkv, *, block_s):
    B, S, D = xq.shape
    n_sb = S // block_s

    act_spec = pl.BlockSpec((1, block_s, D), lambda b, s: (b, s, 0))
    out_spec = pl.BlockSpec((1, block_s, D), lambda b, s: (b, s, 0))
    # Grid-invariant weight/bias blocks: fetched once, stay resident.
    w_spec = pl.BlockSpec((3, D, D), lambda b, s: (0, 0, 0))
    b_spec = pl.BlockSpec((3, 1, D), lambda b, s: (0, 0, 0))

    flops = 2 * 3 * B * S * D * D
    bytes_accessed = int(3 * B * S * D * 4 + 3 * D * D * 2 + 3 * D * 4
                         + 3 * B * S * D * 2)
    vmem_needed = int(2 * (3 * block_s * D * 4 + 3 * D * D * 2 + 3 * D * 4
                           + 3 * block_s * D * 2))

    out_sd = jax.ShapeDtypeStruct((B, S, D), jnp.bfloat16)
    return pl.pallas_call(
        _qkv_proj_kernel,
        out_shape=(out_sd, out_sd, out_sd),
        grid_spec=pltpu.PrefetchScalarGridSpec(
            num_scalar_prefetch=0,
            grid=(B, n_sb),
            in_specs=[act_spec, act_spec, act_spec, w_spec, b_spec],
            out_specs=[out_spec, out_spec, out_spec],
        ),
        compiler_params=pltpu.CompilerParams(
            dimension_semantics=("parallel", "parallel"),
            vmem_limit_bytes=_vmem_limit(vmem_needed)),
        cost_estimate=pl.CostEstimate(
            flops=int(flops), transcendentals=0, bytes_accessed=bytes_accessed),
    )(xq, xk, xv, w_qkv, b_qkv)


# ---------------------------------------------------------------------------
# Kernel 2: causal attention + merge_heads + output projection.
#   grid = (batch, q_blocks); K/V batch-resident; one full-D W_O GEMM per step.
# ---------------------------------------------------------------------------
def _attention_kernel(q_ref, k_ref, v_ref, wo_ref, bo_ref,
                      out_ref, attn_ref, ctx_ref,
                      *, num_heads, head_size, block_q):
    q = q_ref[0]          # (block_q, D) bf16
    k = k_ref[0]          # (S_kv, D)    bf16 (batch-resident, reused across q-blocks)
    v = v_ref[0]          # (S_kv, D)    bf16
    s_kv = k.shape[0]

    scale = jnp.float32(1.0 / math.sqrt(head_size))

    # Per-tile causal mask (== reference's additive -1e20 triu mask: masked
    # weights end up exactly 0 after the exp underflow). Hoisted out of the
    # head loop -- shared by all heads.
    q0 = pl.program_id(1) * block_q
    row = q0 + lax.broadcasted_iota(jnp.int32, (block_q, s_kv), 0)
    col = lax.broadcasted_iota(jnp.int32, (block_q, s_kv), 1)
    future = col > row

    # TODO(synk): exploit causality in the compute (skip fully-masked K/V
    # column tiles flash-style); at these shapes the control flow costs more
    # than the saved exp()/MXU work.
    for h in range(num_heads):        # short unrolled loop over resident K/V
        lo = h * head_size
        qh = q[:, lo:lo + head_size]
        kh = k[:, lo:lo + head_size]
        vh = v[:, lo:lo + head_size]

        # logits = Q K^T / sqrt(head_size), f32 accumulation on the MXU.
        logits = lax.dot_general(qh, kh, (((1,), (1,)), ((), ())),
                                 preferred_element_type=jnp.float32) * scale
        logits = jnp.where(future, jnp.float32(-1e30), logits)

        # Softmax in f32; reciprocal runs on the (otherwise idle) EUP slot.
        m = jnp.max(logits, axis=-1, keepdims=True)
        p = jnp.exp(logits - m)
        w = p * pl.reciprocal(jnp.sum(p, axis=-1, keepdims=True), approx=True)

        attn_ref[0, h] = w            # (block_q, S_kv) f32 attention weights

        # Attended values for this head, written head-major into the merged
        # (block_q, D) bf16 context scratch (merge_heads by construction).
        ctx_h = jnp.dot(w.astype(jnp.bfloat16), vh,
                        preferred_element_type=jnp.float32)
        ctx_ref[:, lo:lo + head_size] = ctx_h.astype(jnp.bfloat16)

    # Single output projection GEMM with full-D contraction depth.
    out = jnp.dot(ctx_ref[...], wo_ref[...],
                  preferred_element_type=jnp.float32) + bo_ref[...]
    out_ref[0] = out.astype(out_ref.dtype)


def _attention_outproj(q_p, k_p, v_p, wo_bf16, bo, *, num_heads, block_q):
    B, S, D = q_p.shape
    hs = D // num_heads
    n_qb = S // block_q

    kernel = functools.partial(_attention_kernel, num_heads=num_heads,
                               head_size=hs, block_q=block_q)

    flops = 4 * B * num_heads * S * S * hs + 2 * B * S * D * D
    bytes_accessed = int(3 * B * S * D * 2 + D * D * 2 + D * 4
                         + B * S * D * 4 + B * num_heads * S * S * 4)
    vmem_needed = int(2 * (block_q * D * 2 + 2 * S * D * 2 + D * D * 2 + D * 4
                           + block_q * D * 4 + num_heads * block_q * S * 4)
                      + block_q * D * 2)

    out, attn = pl.pallas_call(
        kernel,
        out_shape=(
            jax.ShapeDtypeStruct((B, S, D), jnp.float32),
            jax.ShapeDtypeStruct((B, num_heads, S, S), jnp.float32),
        ),
        grid_spec=pltpu.PrefetchScalarGridSpec(
            num_scalar_prefetch=0,
            grid=(B, n_qb),
            in_specs=[
                pl.BlockSpec((1, block_q, D), lambda b, qb: (b, qb, 0)),
                # K/V index maps are invariant across q-blocks -> DMA'd once
                # per batch and kept resident in VMEM.
                pl.BlockSpec((1, S, D), lambda b, qb: (b, 0, 0)),
                pl.BlockSpec((1, S, D), lambda b, qb: (b, 0, 0)),
                # Grid-invariant W_O / b_O blocks (fetched once).
                pl.BlockSpec((D, D), lambda b, qb: (0, 0)),
                pl.BlockSpec((1, D), lambda b, qb: (0, 0)),
            ],
            out_specs=[
                pl.BlockSpec((1, block_q, D), lambda b, qb: (b, qb, 0)),
                pl.BlockSpec((1, num_heads, block_q, S),
                             lambda b, qb: (b, 0, qb, 0)),
            ],
            scratch_shapes=[pltpu.VMEM((block_q, D), jnp.bfloat16)],
        ),
        compiler_params=pltpu.CompilerParams(
            dimension_semantics=("parallel", "parallel"),
            vmem_limit_bytes=_vmem_limit(vmem_needed)),
        cost_estimate=pl.CostEstimate(
            flops=int(flops),
            transcendentals=int(B * num_heads * S * S),
            bytes_accessed=bytes_accessed),
    )(q_p, k_p, v_p, wo_bf16, bo)
    return out, attn


def multi_headed_attention(queries, keys, values, params, *, num_heads):
    """queries/keys/values: (B, S, D) float32.  Returns (out (B,S,D), attn (B,H,S,S))."""
    B, S, D = queries.shape
    assert keys.shape == (B, S, D) and values.shape == (B, S, D)
    assert D % num_heads == 0

    wq, bq, wk, bk, wv, bv, wo, bo = params  # weights (D,D) pre-transposed; biases (1,D)

    # Only the (tiny) weights are stacked/cast in the wrapper; activations go
    # straight into kernel 1 in f32 and are cast to bf16 in-kernel.
    w_qkv = jnp.stack([wq, wk, wv]).astype(jnp.bfloat16)   # (3, D, D) bf16
    b_qkv = jnp.stack([bq, bk, bv])                        # (3, 1, D) f32

    # Seq-tile the projection so full-S blocks never blow the v7x/v5e VMEM
    # budget (sweep block_s upward on v6e/v5e where 128 MiB VMEM allows).
    block_s = 256 if S % 256 == 0 else S
    q_p, k_p, v_p = _qkv_projection(queries, keys, values, w_qkv, b_qkv,
                                    block_s=block_s)       # 3x (B,S,D) bf16

    wo_bf16 = wo.astype(jnp.bfloat16)                      # (D, D) bf16

    # block_q ~128 keeps kernel 2 inside v7x's 64 MiB; sweep 256-512 on v6e/v5e.
    block_q = 128 if S % 128 == 0 else S
    out, attn = _attention_outproj(q_p, k_p, v_p, wo_bf16, bo,
                                   num_heads=num_heads, block_q=block_q)
    return out, attn


def _reference(queries, keys, values, params, *, num_heads):
    """Pure-JAX f32 reference mirroring the PyTorch module."""
    wq, bq, wk, bk, wv, bv, wo, bo = params
    B, S, D = queries.shape
    hs = D // num_heads

    def split(x):  # (B,S,D) -> (B,H,S,hs)
        return x.reshape(B, S, num_heads, hs).transpose(0, 2, 1, 3)

    Q = split(queries @ wq + bq)
    K = split(keys @ wk + bk)
    V = split(values @ wv + bv)

    logits = jnp.einsum("bhqd,bhkd->bhqk", Q, K) / math.sqrt(hs)
    mask = jnp.triu(jnp.ones((S, S), jnp.float32), k=1) * -1e20
    attn = jax.nn.softmax(logits + mask, axis=-1)
    ctx = jnp.einsum("bhqk,bhkd->bhqd", attn, V)
    ctx = ctx.transpose(0, 2, 1, 3).reshape(B, S, D)
    return ctx @ wo + bo, attn


if __name__ == "__main__":
    B, S, D, H = 2, 8, 32, 4   # batch, seq, d_model, num_heads (head_size = 8)

    key = jax.random.PRNGKey(0)
    ks = jax.random.split(key, 12)

    q = jax.random.normal(ks[0], (B, S, D), jnp.float32)
    k = jax.random.normal(ks[1], (B, S, D), jnp.float32)
    v = jax.random.normal(ks[2], (B, S, D), jnp.float32)

    def lin_params(kw, kb):
        w = jax.random.normal(kw, (D, D), jnp.float32) * 0.05   # (in, out) layout
        b = jax.random.normal(kb, (1, D), jnp.float32) * 0.05
        return w, b

    wq, bq = lin_params(ks[3], ks[4])
    wk, bk = lin_params(ks[5], ks[6])
    wv, bv = lin_params(ks[7], ks[8])
    wo, bo = lin_params(ks[9], ks[10])
    params = (wq, bq, wk, bk, wv, bv, wo, bo)

    out, attn = multi_headed_attention(q, k, v, params, num_heads=H)
    out = jax.block_until_ready(out)
    attn = jax.block_until_ready(attn)

    ref_out, ref_attn = _reference(q, k, v, params, num_heads=H)
    assert out.shape == (B, S, D) and attn.shape == (B, H, S, S)
    # bf16 MXU operands (f32 accumulation) -> compare to the f32 reference at
    # bf16-level tolerance.
    assert jnp.allclose(out, ref_out, atol=1e-2, rtol=1e-2)
    assert jnp.allclose(attn, ref_attn, atol=1e-2, rtol=0.0)
    # Causality check: attention on future tokens must be exactly zero.
    assert jnp.all(jnp.triu(attn, k=1) == 0.0)

    print("KERNEL_OK")
</pallas_src>

<mosaic_0001>
module attributes {stable_mosaic.version = 11 : i64} {
  func.func @_qkv_proj_kernel(%arg0: i32, %arg1: i32, %arg2: memref<1x8x32xf32, #tpu.memory_space<vmem>>, %arg3: memref<1x8x32xf32, #tpu.memory_space<vmem>>, %arg4: memref<1x8x32xf32, #tpu.memory_space<vmem>>, %arg5: memref<3x32x32xbf16, #tpu.memory_space<vmem>>, %arg6: memref<3x1x32xf32, #tpu.memory_space<vmem>>, %arg7: memref<1x8x32xbf16, #tpu.memory_space<vmem>>, %arg8: memref<1x8x32xbf16, #tpu.memory_space<vmem>>, %arg9: memref<1x8x32xbf16, #tpu.memory_space<vmem>>) attributes {dimension_semantics = [#tpu.dimension_semantics<parallel>, #tpu.dimension_semantics<parallel>], iteration_bounds = array<i64: 2, 1>, scalar_prefetch = 0 : i64, scratch_operands = 0 : i64, tpu.core_type = #tpu.core_type<tc>, window_params = [{transform_indices = @transform_0, window_bounds = array<i64: 1, 8, 32>}, {transform_indices = @transform_1, window_bounds = array<i64: 1, 8, 32>}, {transform_indices = @transform_2, window_bounds = array<i64: 1, 8, 32>}, {pipeline_mode = #tpu.pipeline_mode<synchronous>, transform_indices = @transform_3, window_bounds = array<i64: 3, 32, 32>}, {pipeline_mode = #tpu.pipeline_mode<synchronous>, transform_indices = @transform_4, window_bounds = array<i64: 3, 1, 32>}, {transform_indices = @transform_5, window_bounds = array<i64: 1, 8, 32>}, {transform_indices = @transform_6, window_bounds = array<i64: 1, 8, 32>}, {transform_indices = @transform_7, window_bounds = array<i64: 1, 8, 32>}]} {
    %c0 = arith.constant 0 : index
    %c0_0 = arith.constant 0 : index
    %c0_1 = arith.constant 0 : index
    %0 = vector.load %arg2[%c0, %c0_0, %c0_1] : memref<1x8x32xf32, #tpu.memory_space<vmem>>, vector<1x8x32xf32>
    %1 = vector.shape_cast %0 : vector<1x8x32xf32> to vector<8x32xf32>
    %2 = arith.truncf %1 : vector<8x32xf32> to vector<8x32xbf16>
    %c0_2 = arith.constant 0 : index
    %c0_3 = arith.constant 0 : index
    %c0_4 = arith.constant 0 : index
    %3 = vector.load %arg5[%c0_2, %c0_3, %c0_4] : memref<3x32x32xbf16, #tpu.memory_space<vmem>>, vector<1x32x32xbf16>
    %4 = vector.shape_cast %3 : vector<1x32x32xbf16> to vector<32x32xbf16>
    %cst = arith.constant dense<0.000000e+00> : vector<8x32xf32>
    %5 = tpu.matmul %2, %4, %cst {dimension_numbers = #tpu.dot_dimension_numbers<[1], [0], [0], [1], [0, 0, 1, 1], [], []>} : vector<8x32xbf16>, vector<32x32xbf16>, vector<8x32xf32> -> vector<8x32xf32>
    %c0_5 = arith.constant 0 : index
    %c0_6 = arith.constant 0 : index
    %c0_7 = arith.constant 0 : index
    %6 = vector.load %arg6[%c0_5, %c0_6, %c0_7] : memref<3x1x32xf32, #tpu.memory_space<vmem>>, vector<1x1x32xf32>
    %7 = vector.shape_cast %6 : vector<1x1x32xf32> to vector<1x32xf32>
    %8 = vector.broadcast %7 : vector<1x32xf32> to vector<8x32xf32>
    %9 = arith.addf %5, %8 : vector<8x32xf32>
    %10 = arith.truncf %9 : vector<8x32xf32> to vector<8x32xbf16>
    %c0_8 = arith.constant 0 : index
    %c0_9 = arith.constant 0 : index
    %c0_10 = arith.constant 0 : index
    %11 = vector.load %arg7[%c0_8, %c0_9, %c0_10] : memref<1x8x32xbf16, #tpu.memory_space<vmem>>, vector<1x8x32xbf16>
    %12 = vector.shape_cast %11 : vector<1x8x32xbf16> to vector<8x32xbf16>
    %13 = vector.shape_cast %10 : vector<8x32xbf16> to vector<1x8x32xbf16>
    tpu.vector_store %arg7[%c0_8, %c0_9, %c0_10], %13 {strides = array<i32>} : memref<1x8x32xbf16, #tpu.memory_space<vmem>>, vector<1x8x32xbf16>,
    %c0_11 = arith.constant 0 : index
    %c0_12 = arith.constant 0 : index
    %c0_13 = arith.constant 0 : index
    %14 = vector.load %arg3[%c0_11, %c0_12, %c0_13] : memref<1x8x32xf32, #tpu.memory_space<vmem>>, vector<1x8x32xf32>
    %15 = vector.shape_cast %14 : vector<1x8x32xf32> to vector<8x32xf32>
    %16 = arith.truncf %15 : vector<8x32xf32> to vector<8x32xbf16>
    %c1 = arith.constant 1 : index
    %c0_14 = arith.constant 0 : index
    %c0_15 = arith.constant 0 : index
    %17 = vector.load %arg5[%c1, %c0_14, %c0_15] : memref<3x32x32xbf16, #tpu.memory_space<vmem>>, vector<1x32x32xbf16>
    %18 = vector.shape_cast %17 : vector<1x32x32xbf16> to vector<32x32xbf16>
    %cst_16 = arith.constant dense<0.000000e+00> : vector<8x32xf32>
    %19 = tpu.matmul %16, %18, %cst_16 {dimension_numbers = #tpu.dot_dimension_numbers<[1], [0], [0], [1], [0, 0, 1, 1], [], []>} : vector<8x32xbf16>, vector<32x32xbf16>, vector<8x32xf32> -> vector<8x32xf32>
    %c1_17 = arith.constant 1 : index
    %c0_18 = arith.constant 0 : index
    %c0_19 = arith.constant 0 : index
    %20 = vector.load %arg6[%c1_17, %c0_18, %c0_19] : memref<3x1x32xf32, #tpu.memory_space<vmem>>, vector<1x1x32xf32>
    %21 = vector.shape_cast %20 : vector<1x1x32xf32> to vector<1x32xf32>
    %22 = vector.broadcast %21 : vector<1x32xf32> to vector<8x32xf32>
    %23 = arith.addf %19, %22 : vector<8x32xf32>
    %24 = arith.truncf %23 : vector<8x32xf32> to vector<8x32xbf16>
    %c0_20 = arith.constant 0 : index
    %c0_21 = arith.constant 0 : index
    %c0_22 = arith.constant 0 : index
    %25 = vector.load %arg8[%c0_20, %c0_21, %c0_22] : memref<1x8x32xbf16, #tpu.memory_space<vmem>>, vector<1x8x32xbf16>
    %26 = vector.shape_cast %25 : vector<1x8x32xbf16> to vector<8x32xbf16>
    %27 = vector.shape_cast %24 : vector<8x32xbf16> to vector<1x8x32xbf16>
    tpu.vector_store %arg8[%c0_20, %c0_21, %c0_22], %27 {strides = array<i32>} : memref<1x8x32xbf16, #tpu.memory_space<vmem>>, vector<1x8x32xbf16>,
    %c0_23 = arith.constant 0 : index
    %c0_24 = arith.constant 0 : index
    %c0_25 = arith.constant 0 : index
    %28 = vector.load %arg4[%c0_23, %c0_24, %c0_25] : memref<1x8x32xf32, #tpu.memory_space<vmem>>, vector<1x8x32xf32>
    %29 = vector.shape_cast %28 : vector<1x8x32xf32> to vector<8x32xf32>
    %30 = arith.truncf %29 : vector<8x32xf32> to vector<8x32xbf16>
    %c2 = arith.constant 2 : index
    %c0_26 = arith.constant 0 : index
    %c0_27 = arith.constant 0 : index
    %31 = vector.load %arg5[%c2, %c0_26, %c0_27] : memref<3x32x32xbf16, #tpu.memory_space<vmem>>, vector<1x32x32xbf16>
    %32 = vector.shape_cast %31 : vector<1x32x32xbf16> to vector<32x32xbf16>
    %cst_28 = arith.constant dense<0.000000e+00> : vector<8x32xf32>
    %33 = tpu.matmul %30, %32, %cst_28 {dimension_numbers = #tpu.dot_dimension_numbers<[1], [0], [0], [1], [0, 0, 1, 1], [], []>} : vector<8x32xbf16>, vector<32x32xbf16>, vector<8x32xf32> -> vector<8x32xf32>
    %c2_29 = arith.constant 2 : index
    %c0_30 = arith.constant 0 : index
    %c0_31 = arith.constant 0 : index
    %34 = vector.load %arg6[%c2_29, %c0_30, %c0_31] : memref<3x1x32xf32, #tpu.memory_space<vmem>>, vector<1x1x32xf32>
    %35 = vector.shape_cast %34 : vector<1x1x32xf32> to vector<1x32xf32>
    %36 = vector.broadcast %35 : vector<1x32xf32> to vector<8x32xf32>
    %37 = arith.addf %33, %36 : vector<8x32xf32>
    %38 = arith.truncf %37 : vector<8x32xf32> to vector<8x32xbf16>
    %c0_32 = arith.constant 0 : index
    %c0_33 = arith.constant 0 : index
    %c0_34 = arith.constant 0 : index
    %39 = vector.load %arg9[%c0_32, %c0_33, %c0_34] : memref<1x8x32xbf16, #tpu.memory_space<vmem>>, vector<1x8x32xbf16>
    %40 = vector.shape_cast %39 : vector<1x8x32xbf16> to vector<8x32xbf16>
    %41 = vector.shape_cast %38 : vector<8x32xbf16> to vector<1x8x32xbf16>
    tpu.vector_store %arg9[%c0_32, %c0_33, %c0_34], %41 {strides = array<i32>} : memref<1x8x32xbf16, #tpu.memory_space<vmem>>, vector<1x8x32xbf16>,
    return
  }
  func.func @transform_0(%arg0: i32, %arg1: i32) -> (i32, i32, i32) {
    %c0_i32 = arith.constant 0 : i32
    %c0_i32_0 = arith.constant 0 : i32
    return %arg0, %arg1, %c0_i32 : i32, i32, i32
  }
  func.func @transform_1(%arg0: i32, %arg1: i32) -> (i32, i32, i32) {
    %c0_i32 = arith.constant 0 : i32
    %c0_i32_0 = arith.constant 0 : i32
    return %arg0, %arg1, %c0_i32 : i32, i32, i32
  }
  func.func @transform_2(%arg0: i32, %arg1: i32) -> (i32, i32, i32) {
    %c0_i32 = arith.constant 0 : i32
    %c0_i32_0 = arith.constant 0 : i32
    return %arg0, %arg1, %c0_i32 : i32, i32, i32
  }
  func.func @transform_3(%arg0: i32, %arg1: i32) -> (i32, i32, i32) {
    %c0_i32 = arith.constant 0 : i32
    %c0_i32_0 = arith.constant 0 : i32
    %c0_i32_1 = arith.constant 0 : i32
    %c0_i32_2 = arith.constant 0 : i32
    return %c0_i32, %c0_i32_0, %c0_i32_1 : i32, i32, i32
  }
  func.func @transform_4(%arg0: i32, %arg1: i32) -> (i32, i32, i32) {
    %c0_i32 = arith.constant 0 : i32
    %c0_i32_0 = arith.constant 0 : i32
    %c0_i32_1 = arith.constant 0 : i32
    %c0_i32_2 = arith.constant 0 : i32
    return %c0_i32, %c0_i32_0, %c0_i32_1 : i32, i32, i32
  }
  func.func @transform_5(%arg0: i32, %arg1: i32) -> (i32, i32, i32) {
    %c0_i32 = arith.constant 0 : i32
    %c0_i32_0 = arith.constant 0 : i32
    return %arg0, %arg1, %c0_i32 : i32, i32, i32
  }
  func.func @transform_6(%arg0: i32, %arg1: i32) -> (i32, i32, i32) {
    %c0_i32 = arith.constant 0 : i32
    %c0_i32_0 = arith.constant 0 : i32
    return %arg0, %arg1, %c0_i32 : i32, i32, i32
  }
  func.func @transform_7(%arg0: i32, %arg1: i32) -> (i32, i32, i32) {
    %c0_i32 = arith.constant 0 : i32
    %c0_i32_0 = arith.constant 0 : i32
    return %arg0, %arg1, %c0_i32 : i32, i32, i32
  }
}

</mosaic_0001>

<llo_original>
// kernel: tpu_custom_call.1
$region0: #{tpu_custom_call.1}
  #allocation0 [shape = 'u32[]', space=smem, size = 0x4, offset = 0x4, fixed_abs, tag = 'smem constant byte address 0x4 - core index']
  #allocation1 [shape = 'u32[144,128]{1,0:T(1,128)}', space=vmem, size = 0x12000, scoped, tag = 'internal scratch']
  %s0 = inlined_call_operand.hbm [shape: f32[2,8,32], index: 0, kind: input, shape index: {}]
  %s1 = inlined_call_operand.hbm [shape: f32[2,8,32], index: 1, kind: input, shape index: {}]
  %s2 = inlined_call_operand.hbm [shape: f32[2,8,32], index: 2, kind: input, shape index: {}]
  %s3 = inlined_call_operand.hbm [shape: bf16[3,32,32], index: 3, kind: input, shape index: {}]
  %s4 = inlined_call_operand.vmem [shape: f32[3,1,32], index: 4, kind: input, shape index: {}]
  %s5 = inlined_call_operand.hbm [shape: bf16[2,8,32], index: 5, kind: output, shape index: {0}]
  %s6 = inlined_call_operand.hbm [shape: bf16[2,8,32], index: 6, kind: output, shape index: {1}]
  %s7 = inlined_call_operand.hbm [shape: bf16[2,8,32], index: 7, kind: output, shape index: {2}]
  %8 = xla_tuple %s5, %s6, %s7
  %s9 = sld [smem:[#allocation0]]
  $region85: #{tpu_custom_call.1} parent=0
    _
  %s11 = ssub.s32 1, %s9
  %s12 = scalar_select 0, %s11, %s9
  $region1: #{tpu_custom_call.1} parent=0
    #allocation2 [shape = 'u8[8192]{0}', space=vmem, size = 0x2000, scoped, tag = 'input window, operand 0']
    #allocation3 [shape = 's32[2]{0}', space=sflag, size = 0x8, scoped, tag = 'scoped memory for tpu_custom_call.1']
    #allocation4 [shape = 's32[2]{0}', space=sflag, size = 0x8, scoped, tag = 'scoped memory for tpu_custom_call.1']
    #allocation5 [shape = 'u8[8192]{0}', space=vmem, size = 0x2000, scoped, tag = 'input window, operand 1']
    #allocation6 [shape = 's32[2]{0}', space=sflag, size = 0x8, scoped, tag = 'scoped memory for tpu_custom_call.1']
    #allocation7 [shape = 'u8[8192]{0}', space=vmem, size = 0x2000, scoped, tag = 'input window, operand 2']
    #allocation8 [shape = 'u8[24576]{0}', space=vmem, size = 0x6000, scoped, tag = 'input window, operand 3, single buffered']
    #allocation9 [shape = 's32[1]{0}', space=sflag, size = 0x4, scoped, tag = 'scoped memory for tpu_custom_call.1']
    #allocation10 [shape = 'u8[4096]{0}', space=vmem, size = 0x1000, scoped, tag = 'output window, operand 0']
    #allocation11 [shape = 'u8[4096]{0}', space=vmem, size = 0x1000, scoped, tag = 'output window, operand 1']
    #allocation12 [shape = 's32[2]{0}', space=sflag, size = 0x8, scoped, tag = 'scoped memory for tpu_custom_call.1']
    #allocation13 [shape = 'u8[4096]{0}', space=vmem, size = 0x1000, scoped, tag = 'output window, operand 2']
    %13 = vsyncpa [#allocation3], 0
    %s14 = scalar_lea.sflag [#allocation3], 1
    %15 = vsyncpa %s14, 0
    %16 = vsyncpa [#allocation6], 0
    %s17 = scalar_lea.sflag [#allocation6], 1
    %18 = vsyncpa %s17, 0
    %19 = vsyncpa [#allocation9], 0
    %20 = vsyncpa [#allocation4], 0
    %s21 = scalar_lea.sflag [#allocation4], 1
    %22 = vsyncpa %s21, 0
    %23 = vsyncpa [#allocation12], 0
    %s24 = scalar_lea.sflag [#allocation12], 1
    %25 = vsyncpa %s24, 0
    loop: start=0, step=1, limit=4
    $region2: #{tpu_custom_call.1} parent=1 // loop_pre_header
      _
    $region3: #{tpu_custom_call.1} parent=1 // loop_header
      %s27 = sphi 0, %s31
      %p28 = scmp.ge.s32.totalorder %s27, 4
      %s34 = sphi 0, %s46
      %s35 = sphi 0, %s42
      %s36 = sphi 0, %s34
      %s37 = sphi 0, %s35
      %s38 = sphi 0, %s36
      %s39 = sphi 0, %s37
      %s51 = sphi 0, %s53
      %s54 = sphi 0, %s51
      %s55 = sphi 0, %s54
      %s71 = sphi 0, %s55
      %s79 = sphi 0, %s81
      %s82 = sphi 0, %s79
      %s83 = sphi 0, %s82
      %s99 = sphi 0, %s83
      %s107 = sphi 0, %s109
      %s110 = sphi 0, %s107
      %s111 = sphi 0, %s110
      %s127 = sphi 0, %s111
      %s131 = sphi 0, %s131
      %s133 = sphi 0, %s131
      %s134 = sphi 0, %s133
      %s148 = sphi 0, %s134
      %s152 = sphi 0, %s152
      %s154 = sphi 0, %s152
      %s155 = sphi 0, %s154
      %s169 = sphi 0, %s155
      %s177 = sphi 0, %s179
      %s180 = sphi 0, %s177
      %s181 = sphi 0, %s180
      %s197 = sphi 0, %s181
      %s205 = sphi 0, %s207
      %s208 = sphi 0, %s205
      %s209 = sphi 0, %s208
      %s225 = sphi 0, %s209
      %s233 = sphi 0, %s235
      %s236 = sphi 0, %s233
      %s237 = sphi 0, %s236
      %s253 = sphi 0, %s237
    $region4: #{tpu_custom_call.1} parent=1 // loop_header_branch
      %30 = sbr.rel (%p28) target = $region8
    $region5: #{tpu_custom_call.1} parent=1 // loop_body
      %s32 = ssub.s32 %s27, 1
      %s33 = ssub.s32 %s27, 2
      %s40 = sadd.s32 1, %s35
      %p41 = scmp.ge.s32.totalorder %s40, 1
      %s42 = scalar_select %p41, 0, %s40
      %s43 = sadd.s32 1, %s34
      %s44 = scalar_select %p41, %s43, %s34
      %p45 = scmp.ge.s32.totalorder %s44, 2
      %s46 = scalar_select %p45, 0, %s44
      %s47 = ssub.s32 %s34, %s46
      %s48 = ssub.s32 %s35, %s42
      %s49 = sor.u32 %s47, %s48
      %p50 = scmp.eq.s32.totalorder %s49, 0
      %s52 = sadd.s32 %s51, 1
      %s53 = scalar_select %p50, %s51, %s52
      %p56 = pneg %p50
      %p57 = scmp.eq.s32.totalorder %s27, 1
      %p58 = por %p56, %p57
      %p59 = scmp.ne.s32.totalorder %s51, %s54
      %p60 = scmp.eq.s32.totalorder %s27, 0
      %p61 = por %p59, %p60
      %p62 = scmp.ne.s32.totalorder %s51, %s54
      %p63 = scmp.eq.s32.totalorder %s32, 1
      %p64 = por %p62, %p63
      %p65 = scmp.ne.s32.totalorder %s54, %s55
      %p66 = scmp.eq.s32.totalorder %s32, 0
      %p67 = por %p65, %p66
      %p68 = scmp.ne.s32.totalorder %s54, %s55
      %p69 = scmp.eq.s32.totalorder %s33, 1
      %p70 = por %p68, %p69
      %p72 = scmp.ne.s32.totalorder %s55, %s71
      %p73 = scmp.eq.s32.totalorder %s33, 0
      %p74 = por %p72, %p73
      %s75 = ssub.s32 %s34, %s46
      %s76 = ssub.s32 %s35, %s42
      %s77 = sor.u32 %s75, %s76
      %p78 = scmp.eq.s32.totalorder %s77, 0
      %s80 = sadd.s32 %s79, 1
      %s81 = scalar_select %p78, %s79, %s80
      %p84 = pneg %p78
      %p85 = scmp.eq.s32.totalorder %s27, 1
      %p86 = por %p84, %p85
      %p87 = scmp.ne.s32.totalorder %s79, %s82
      %p88 = scmp.eq.s32.totalorder %s27, 0
      %p89 = por %p87, %p88
      %p90 = scmp.ne.s32.totalorder %s79, %s82
      %p91 = scmp.eq.s32.totalorder %s32, 1
      %p92 = por %p90, %p91
      %p93 = scmp.ne.s32.totalorder %s82, %s83
      %p94 = scmp.eq.s32.totalorder %s32, 0
      %p95 = por %p93, %p94
      %p96 = scmp.ne.s32.totalorder %s82, %s83
      %p97 = scmp.eq.s32.totalorder %s33, 1
      %p98 = por %p96, %p97
      %p100 = scmp.ne.s32.totalorder %s83, %s99
      %p101 = scmp.eq.s32.totalorder %s33, 0
      %p102 = por %p100, %p101
      %s103 = ssub.s32 %s34, %s46
      %s104 = ssub.s32 %s35, %s42
      %s105 = sor.u32 %s103, %s104
      %p106 = scmp.eq.s32.totalorder %s105, 0
      %s108 = sadd.s32 %s107, 1
      %s109 = scalar_select %p106, %s107, %s108
      %p112 = pneg %p106
      %p113 = scmp.eq.s32.totalorder %s27, 1
      %p114 = por %p112, %p113
      %p115 = scmp.ne.s32.totalorder %s107, %s110
      %p116 = scmp.eq.s32.totalorder %s27, 0
      %p117 = por %p115, %p116
      %p118 = scmp.ne.s32.totalorder %s107, %s110
      %p119 = scmp.eq.s32.totalorder %s32, 1
      %p120 = por %p118, %p119
      %p121 = scmp.ne.s32.totalorder %s110, %s111
      %p122 = scmp.eq.s32.totalorder %s32, 0
      %p123 = por %p121, %p122
      %p124 = scmp.ne.s32.totalorder %s110, %s111
      %p125 = scmp.eq.s32.totalorder %s33, 1
      %p126 = por %p124, %p125
      %p128 = scmp.ne.s32.totalorder %s111, %s127
      %p129 = scmp.eq.s32.totalorder %s33, 0
      %p130 = por %p128, %p129
      %s132 = sadd.s32 %s131, 1
      %p135 = scmp.eq.s32.totalorder %s27, 1
      %p136 = scmp.ne.s32.totalorder %s131, %s133
      %p137 = scmp.eq.s32.totalorder %s27, 0
      %p138 = por %p136, %p137
      %p139 = scmp.ne.s32.totalorder %s131, %s133
      %p140 = scmp.eq.s32.totalorder %s32, 1
      %p141 = por %p139, %p140
      %p142 = scmp.ne.s32.totalorder %s133, %s134
      %p143 = scmp.eq.s32.totalorder %s32, 0
      %p144 = por %p142, %p143
      %p145 = scmp.ne.s32.totalorder %s133, %s134
      %p146 = scmp.eq.s32.totalorder %s33, 1
      %p147 = por %p145, %p146
      %p149 = scmp.ne.s32.totalorder %s134, %s148
      %p150 = scmp.eq.s32.totalorder %s33, 0
      %p151 = por %p149, %p150
      %s153 = sadd.s32 %s152, 1
      %p156 = scmp.eq.s32.totalorder %s27, 1
      %p157 = scmp.ne.s32.totalorder %s152, %s154
      %p158 = scmp.eq.s32.totalorder %s27, 0
      %p159 = por %p157, %p158
      %p160 = scmp.ne.s32.totalorder %s152, %s154
      %p161 = scmp.eq.s32.totalorder %s32, 1
      %p162 = por %p160, %p161
      %p163 = scmp.ne.s32.totalorder %s154, %s155
      %p164 = scmp.eq.s32.totalorder %s32, 0
      %p165 = por %p163, %p164
      %p166 = scmp.ne.s32.totalorder %s154, %s155
      %p167 = scmp.eq.s32.totalorder %s33, 1
      %p168 = por %p166, %p167
      %p170 = scmp.ne.s32.totalorder %s155, %s169
      %p171 = scmp.eq.s32.totalorder %s33, 0
      %p172 = por %p170, %p171
      %s173 = ssub.s32 %s34, %s46
      %s174 = ssub.s32 %s35, %s42
      %s175 = sor.u32 %s173, %s174
      %p176 = scmp.eq.s32.totalorder %s175, 0
      %s178 = sadd.s32 %s177, 1
      %s179 = scalar_select %p176, %s177, %s178
      %p182 = pneg %p176
      %p183 = scmp.eq.s32.totalorder %s27, 1
      %p184 = por %p182, %p183
      %p185 = scmp.ne.s32.totalorder %s177, %s180
      %p186 = scmp.eq.s32.totalorder %s27, 0
      %p187 = por %p185, %p186
      %p188 = scmp.ne.s32.totalorder %s177, %s180
      %p189 = scmp.eq.s32.totalorder %s32, 1
      %p190 = por %p188, %p189
      %p191 = scmp.ne.s32.totalorder %s180, %s181
      %p192 = scmp.eq.s32.totalorder %s32, 0
      %p193 = por %p191, %p192
      %p194 = scmp.ne.s32.totalorder %s180, %s181
      %p195 = scmp.eq.s32.totalorder %s33, 1
      %p196 = por %p194, %p195
      %p198 = scmp.ne.s32.totalorder %s181, %s197
      %p199 = scmp.eq.s32.totalorder %s33, 0
      %p200 = por %p198, %p199
      %s201 = ssub.s32 %s34, %s46
      %s202 = ssub.s32 %s35, %s42
      %s203 = sor.u32 %s201, %s202
      %p204 = scmp.eq.s32.totalorder %s203, 0
      %s206 = sadd.s32 %s205, 1
      %s207 = scalar_select %p204, %s205, %s206
      %p210 = pneg %p204
      %p211 = scmp.eq.s32.totalorder %s27, 1
      %p212 = por %p210, %p211
      %p213 = scmp.ne.s32.totalorder %s205, %s208
      %p214 = scmp.eq.s32.totalorder %s27, 0
      %p215 = por %p213, %p214
      %p216 = scmp.ne.s32.totalorder %s205, %s208
      %p217 = scmp.eq.s32.totalorder %s32, 1
      %p218 = por %p216, %p217
      %p219 = scmp.ne.s32.totalorder %s208, %s209
      %p220 = scmp.eq.s32.totalorder %s32, 0
      %p221 = por %p219, %p220
      %p222 = scmp.ne.s32.totalorder %s208, %s209
      %p223 = scmp.eq.s32.totalorder %s33, 1
      %p224 = por %p222, %p223
      %p226 = scmp.ne.s32.totalorder %s209, %s225
      %p227 = scmp.eq.s32.totalorder %s33, 0
      %p228 = por %p226, %p227
      %s229 = ssub.s32 %s34, %s46
      %s230 = ssub.s32 %s35, %s42
      %s231 = sor.u32 %s229, %s230
      %p232 = scmp.eq.s32.totalorder %s231, 0
      %s234 = sadd.s32 %s233, 1
      %s235 = scalar_select %p232, %s233, %s234
      %p238 = pneg %p232
      %p239 = scmp.eq.s32.totalorder %s27, 1
      %p240 = por %p238, %p239
      %p241 = scmp.ne.s32.totalorder %s233, %s236
      %p242 = scmp.eq.s32.totalorder %s27, 0
      %p243 = por %p241, %p242
      %p244 = scmp.ne.s32.totalorder %s233, %s236
      %p245 = scmp.eq.s32.totalorder %s32, 1
      %p246 = por %p244, %p245
      %p247 = scmp.ne.s32.totalorder %s236, %s237
      %p248 = scmp.eq.s32.totalorder %s32, 0
      %p249 = por %p247, %p248
      %p250 = scmp.ne.s32.totalorder %s236, %s237
      %p251 = scmp.eq.s32.totalorder %s33, 1
      %p252 = por %p250, %p251
      %p254 = scmp.ne.s32.totalorder %s237, %s253
      %p255 = scmp.eq.s32.totalorder %s33, 0
      %p256 = por %p254, %p255
      %p257 = scmp.le.s32.totalorder 1, %s27
      %p258 = scmp.lt.s32.totalorder %s27, 3
      %p259 = pnand %p257, %p258
      %p260 = pneg %p259
      // Predicated region
      $region9: #{tpu_custom_call.1} parent=5 // pred_check
        _
      $region10: #{tpu_custom_call.1} parent=5 // pred_check_branch
        %262 = sbr.rel (%p259) target = $region12
      $region11: #{tpu_custom_call.1} parent=5 // pred_region
        %s263 = ssub.s32 %s27, 1
        // Predicated region
        $region13: #{tpu_custom_call.1} parent=11 // pred_check
          %p264 = pneg %p144
        $region14: #{tpu_custom_call.1} parent=11 // pred_check_branch
          %266 = sbr.rel (%p264) target = $region16
        $region15: #{tpu_custom_call.1} parent=11 // pred_region
          %s268 = ssub.s32 768, 768
          %269 = vsyncadd [#allocation9], %s268
          %s270 = sshll.u32 [#allocation8], 4
          %s271 = int_to_ptr.vmem [resolvable:$true] %s270
          %276 = dma.hbm_to_vmem [thread:$0]  %s3, 768, %s271, [#allocation9], 64, 64, 4
        $region16: #{tpu_custom_call.1} parent=11 // pred_fallthru
          _
        // Predicated region
        $region17: #{tpu_custom_call.1} parent=11 // pred_check
          %p277 = pneg %p165
        $region18: #{tpu_custom_call.1} parent=11 // pred_check_branch
          %279 = sbr.rel (%p277) target = $region20
        $region19: #{tpu_custom_call.1} parent=11 // pred_region
          _
        $region20: #{tpu_custom_call.1} parent=11 // pred_fallthru
          _
      $region12: #{tpu_custom_call.1} parent=5 // pred_fallthru
        _
      %p280 = scmp.lt.s32.totalorder %s27, 2
      // Predicated region
      $region21: #{tpu_custom_call.1} parent=5 // pred_check
        %p281 = pneg %p280
      $region22: #{tpu_custom_call.1} parent=5 // pred_check_branch
        %283 = sbr.rel (%p281) target = $region24
      $region23: #{tpu_custom_call.1} parent=5 // pred_region
        // Predicated region
        $region25: #{tpu_custom_call.1} parent=23 // pred_check
          %p284 = pneg %p61
        $region26: #{tpu_custom_call.1} parent=23 // pred_check_branch
          %286 = sbr.rel (%p284) target = $region28
        $region27: #{tpu_custom_call.1} parent=23 // pred_region
          %s287 = sand.u32 %s51, 1
          %s288 = scalar_lea.sflag [#allocation3], %s287
          %s289 = sand.u32 %s51, 1
          %s290 = smul.addr %s289, 8
          %s291 = scalar_lea.vmem [#allocation2], %s290
          %s293 = ssub.s32 128, 128
          %294 = vsyncadd %s288, %s293
          %s295 = sadd.s32 %s35, %s34
          %s296 = smul.addr %s295, 128
          %s297 = scalar_lea.hbm %s0, %s296
          %s299 = sshll.u32 %s291, 4
          %s300 = int_to_ptr.vmem [resolvable:$true] %s299
          %302 = dma.hbm_to_vmem [thread:$0]  %s297, 128, %s300, %s288
        $region28: #{tpu_custom_call.1} parent=23 // pred_fallthru
          _
        // Predicated region
        $region29: #{tpu_custom_call.1} parent=23 // pred_check
          %p303 = pneg %p89
        $region30: #{tpu_custom_call.1} parent=23 // pred_check_branch
          %305 = sbr.rel (%p303) target = $region32
        $region31: #{tpu_custom_call.1} parent=23 // pred_region
          %s306 = sand.u32 %s27, 1
          %s307 = scalar_lea.sflag [#allocation6], %s306
          %s308 = sand.u32 %s79, 1
          %s309 = smul.addr %s308, 8
          %s310 = scalar_lea.vmem [#allocation5], %s309
          %s312 = ssub.s32 128, 128
          %313 = vsyncadd %s307, %s312
          %s314 = sadd.s32 %s35, %s34
          %s315 = smul.addr %s314, 128
          %s316 = scalar_lea.hbm %s1, %s315
          %s318 = sshll.u32 %s310, 4
          %s319 = int_to_ptr.vmem [resolvable:$true] %s318
          %321 = dma.hbm_to_vmem [thread:$0]  %s316, 128, %s319, %s307
        $region32: #{tpu_custom_call.1} parent=23 // pred_fallthru
          _
        // Predicated region
        $region33: #{tpu_custom_call.1} parent=23 // pred_check
          %p322 = pneg %p117
        $region34: #{tpu_custom_call.1} parent=23 // pred_check_branch
          %324 = sbr.rel (%p322) target = $region36
        $region35: #{tpu_custom_call.1} parent=23 // pred_region
          %s325 = sand.u32 %s27, 1
          %s326 = scalar_lea.sflag [#allocation6], %s325
          %s327 = sand.u32 %s107, 1
          %s328 = smul.addr %s327, 8
          %s329 = scalar_lea.vmem [#allocation7], %s328
          %s331 = ssub.s32 128, 128
          %332 = vsyncadd %s326, %s331
          %s333 = sadd.s32 %s35, %s34
          %s334 = smul.addr %s333, 128
          %s335 = scalar_lea.hbm %s2, %s334
          %s337 = sshll.u32 %s329, 4
          %s338 = int_to_ptr.vmem [resolvable:$true] %s337
          %340 = dma.hbm_to_vmem [thread:$0]  %s335, 128, %s338, %s326
        $region36: #{tpu_custom_call.1} parent=23 // pred_fallthru
          _
      $region24: #{tpu_custom_call.1} parent=5 // pred_fallthru
        _
      %p341 = scmp.le.s32.totalorder 1, %s27
      %p342 = scmp.lt.s32.totalorder %s27, 3
      %p343 = pnand %p341, %p342
      %p344 = pneg %p343
      // Predicated region
      $region37: #{tpu_custom_call.1} parent=5 // pred_check
        _
      $region38: #{tpu_custom_call.1} parent=5 // pred_check_branch
        %346 = sbr.rel (%p343) target = $region40
      $region39: #{tpu_custom_call.1} parent=5 // pred_region
        %s347 = ssub.s32 %s27, 1
        %s348 = sand.u32 %s54, 1
        %s349 = scalar_lea.sflag [#allocation3], %s348
        %s350 = sand.u32 %s54, 1
        %s351 = smul.addr %s350, 8
        %s352 = scalar_lea.vmem [#allocation2], %s351
        // Predicated region
        $region41: #{tpu_custom_call.1} parent=39 // pred_check
          %p353 = pneg %p67
        $region42: #{tpu_custom_call.1} parent=39 // pred_check_branch
          %355 = sbr.rel (%p353) target = $region44
        $region43: #{tpu_custom_call.1} parent=39 // pred_region
          %356 = dma.done %s349, 128
        $region44: #{tpu_custom_call.1} parent=39 // pred_fallthru
          _
        %s357 = sand.u32 %s32, 1
        %s358 = scalar_lea.sflag [#allocation6], %s357
        %s359 = sand.u32 %s82, 1
        %s360 = smul.addr %s359, 8
        %s361 = scalar_lea.vmem [#allocation5], %s360
        // Predicated region
        $region45: #{tpu_custom_call.1} parent=39 // pred_check
          %p362 = pneg %p95
        $region46: #{tpu_custom_call.1} parent=39 // pred_check_branch
          %364 = sbr.rel (%p362) target = $region48
        $region47: #{tpu_custom_call.1} parent=39 // pred_region
          %365 = dma.done %s358, 128
        $region48: #{tpu_custom_call.1} parent=39 // pred_fallthru
          _
        %s366 = sand.u32 %s32, 1
        %s367 = scalar_lea.sflag [#allocation6], %s366
        %s368 = sand.u32 %s110, 1
        %s369 = smul.addr %s368, 8
        %s370 = scalar_lea.vmem [#allocation7], %s369
        // Predicated region
        $region49: #{tpu_custom_call.1} parent=39 // pred_check
          %p371 = pneg %p123
        $region50: #{tpu_custom_call.1} parent=39 // pred_check_branch
          %373 = sbr.rel (%p371) target = $region52
        $region51: #{tpu_custom_call.1} parent=39 // pred_region
          %374 = dma.done %s367, 128
        $region52: #{tpu_custom_call.1} parent=39 // pred_fallthru
          _
        // Predicated region
        $region53: #{tpu_custom_call.1} parent=39 // pred_check
          %p375 = pneg %p144
        $region54: #{tpu_custom_call.1} parent=39 // pred_check_branch
          %377 = sbr.rel (%p375) target = $region56
        $region55: #{tpu_custom_call.1} parent=39 // pred_region
          %378 = dma.done [#allocation9], 768
        $region56: #{tpu_custom_call.1} parent=39 // pred_fallthru
          _
        %s379 = sand.u32 %s54, 1
        %s380 = scalar_lea.sflag [#allocation3], %s379
        %s381 = sand.u32 %s54, 1
        %s382 = smul.addr %s381, 8
        %s383 = scalar_lea.vmem [#allocation2], %s382
        %p384 = pneg %p67
        %p385 = pneg %p64
        %s386 = sand.u32 %s32, 1
        %s387 = scalar_lea.sflag [#allocation6], %s386
        %s388 = sand.u32 %s82, 1
        %s389 = smul.addr %s388, 8
        %s390 = scalar_lea.vmem [#allocation5], %s389
        %p391 = pneg %p95
        %p392 = pneg %p92
        %s393 = sand.u32 %s32, 1
        %s394 = scalar_lea.sflag [#allocation6], %s393
        %s395 = sand.u32 %s110, 1
        %s396 = smul.addr %s395, 8
        %s397 = scalar_lea.vmem [#allocation7], %s396
        %p398 = pneg %p123
        %p399 = pneg %p120
        %p400 = pneg %p144
        %p401 = pneg %p141
        %p402 = pneg %p165
        %p403 = pneg %p162
        %p404 = pneg %p193
        %p405 = pneg %p190
        %s406 = sand.u32 %s180, 1
        %s407 = scalar_lea.sflag [#allocation4], %s406
        %s408 = sand.u32 %s180, 1
        %s409 = smul.addr %s408, 4
        %s410 = scalar_lea.vmem [#allocation10], %s409
        %p411 = pneg %p221
        %p412 = pneg %p218
        %s413 = sand.u32 %s32, 1
        %s414 = scalar_lea.sflag [#allocation12], %s413
        %s415 = sand.u32 %s208, 1
        %s416 = smul.addr %s415, 4
        %s417 = scalar_lea.vmem [#allocation11], %s416
        %p418 = pneg %p249
        %p419 = pneg %p246
        %s420 = sand.u32 %s32, 1
        %s421 = scalar_lea.sflag [#allocation12], %s420
        %s422 = sand.u32 %s236, 1
        %s423 = smul.addr %s422, 4
        %s424 = scalar_lea.vmem [#allocation13], %s423
        %v426 = vld [vmem:[%s352] sm:$0xff]
        %v427 = vpack.c.bf16 %v426, %v426
        %v428 = vld [vmem:[#allocation8] sm:$0xf]
        %v429 = vld [vmem:[#allocation8 + $0x4] sm:$0xf]
        %v430 = vld [vmem:[#allocation8 + $0x8] sm:$0xf]
        %v431 = vld [vmem:[#allocation8 + $0xc] sm:$0xf]
        %v432 = vld [vmem:[%s4] sm:$0x1]
        %v434 = vlaneseq
        %v435 = vshrl.u32 %v434, 7
        %v436 = vsub.s32 0, %v435
        %v437 = vrot.slane %v432, %v436
        %v443 = vunpack.c.l.b16 %v428
        %v444 = vunpack.c.l.b16 %v429
        %v445 = vunpack.c.l.b16 %v430
        %v446 = vunpack.c.l.b16 %v431
        %v447 = vpack.c.b16 %v444, %v443
        %v448 = vpack.c.b16 %v446, %v445
        %vm451 = vcmask 261120
        %v453 = vsel %vm451, %v427, 0
        %455 = vmatprep.subr.bf16.mxu0 0
        %456 = vmatpush1.bf16.msra.mxu0 %v447
        %457 = vmatprep.subr.bf16.mxu0 0
        %458 = vmatpush1.bf16.msra.mxu0 %v448
        %459 = vmatprep.subr.bf16.mxu0 0
        %460 = vmatpush1.bf16.msra.mxu0 0
        %461 = vmatprep.subr.bf16.mxu0 0
        %462 = vmatpush1.bf16.msra.mxu0 0
        %463 = vmatprep.subr.bf16.mxu0 0
        %464 = vmatpush1.bf16.msra.mxu0 0
        %465 = vmatprep.subr.bf16.mxu0 0
        %466 = vmatpush1.bf16.msra.mxu0 0
        %467 = vmatprep.subr.bf16.mxu0 0
        %468 = vmatpush1.bf16.msra.mxu0 0
        %469 = vmatprep.subr.bf16.mxu0 0
        %470 = vmatpush1.bf16.msra.mxu0 0
        %471 = vmatprep.subr.bf16.mxu0 0
        %472 = vmatpush1.bf16.msra.mxu0 0
        %473 = vmatprep.subr.bf16.mxu0 0
        %474 = vmatpush1.bf16.msra.mxu0 0
        %475 = vmatprep.subr.bf16.mxu0 0
        %476 = vmatpush1.bf16.msra.mxu0 0
        %477 = vmatprep.subr.bf16.mxu0 0
        %478 = vmatpush1.bf16.msra.mxu0 0
        %479 = vmatprep.subr.bf16.mxu0 0
        %480 = vmatpush1.bf16.msra.mxu0 0
        %481 = vmatprep.subr.bf16.mxu0 0
        %482 = vmatpush1.bf16.msra.mxu0 0
        %483 = vmatprep.subr.bf16.mxu0 0
        %484 = vmatpush1.bf16.msra.mxu0 0
        %485 = vmatprep.subr.bf16.mxu0 0
        %486 = vmatpush1.bf16.msra.mxu0 0
        %487 = vmatprep.mubr.bf16.mxu0 0
        %488 = vmatmul.mubr.bf16.gmra.mrb[0].mxu0 %v453
        %v489 = vpop.f32.mrb[0].mxu0
        %v490 = vadd.f32 %v437, %v489
        %v491 = vpop.f32.mrb[0].mxu0
        %v492 = vpop.f32.mrb[0].mxu0
        %v493 = vpop.f32.mrb[0].mxu0
        %494 = vdwg.mxu0
        %v495 = vpack.c.bf16 %v490, %v490
        %vm496 = vcmask 257024
        %497 = vst.msk [vmem:[%s410] sm:$0xf] %vm496, %v495
        %v498 = vld [vmem:[%s361] sm:$0xff]
        %v499 = vpack.c.bf16 %v498, %v498
        %s500 = scalar_lea.vmem [#allocation8], 16
        %v501 = vld [vmem:[%s500] sm:$0xf]
        %v502 = vld [vmem:[%s500 + $0x4] sm:$0xf]
        %v503 = vld [vmem:[%s500 + $0x8] sm:$0xf]
        %v504 = vld [vmem:[%s500 + $0xc] sm:$0xf]
        %s505 = scalar_lea.vmem %s4, 1
        %v506 = vld [vmem:[%s505] sm:$0x1]
        %v508 = vlaneseq
        %v509 = vshrl.u32 %v508, 7
        %v510 = vsub.s32 0, %v509
        %v511 = vrot.slane %v506, %v510
        %v517 = vunpack.c.l.b16 %v501
        %v518 = vunpack.c.l.b16 %v502
        %v519 = vunpack.c.l.b16 %v503
        %v520 = vunpack.c.l.b16 %v504
        %v521 = vpack.c.b16 %v518, %v517
        %v522 = vpack.c.b16 %v520, %v519
        %v526 = vsel %vm451, %v499, 0
        %528 = vmatprep.subr.bf16.mxu0 0
        %529 = vmatpush1.bf16.msra.mxu0 %v521
        %530 = vmatprep.subr.bf16.mxu0 0
        %531 = vmatpush1.bf16.msra.mxu0 %v522
        %532 = vmatprep.subr.bf16.mxu0 0
        %533 = vmatpush1.bf16.msra.mxu0 0
        %534 = vmatprep.subr.bf16.mxu0 0
        %535 = vmatpush1.bf16.msra.mxu0 0
        %536 = vmatprep.subr.bf16.mxu0 0
        %537 = vmatpush1.bf16.msra.mxu0 0
        %538 = vmatprep.subr.bf16.mxu0 0
        %539 = vmatpush1.bf16.msra.mxu0 0
        %540 = vmatprep.subr.bf16.mxu0 0
        %541 = vmatpush1.bf16.msra.mxu0 0
        %542 = vmatprep.subr.bf16.mxu0 0
        %543 = vmatpush1.bf16.msra.mxu0 0
        %544 = vmatprep.subr.bf16.mxu0 0
        %545 = vmatpush1.bf16.msra.mxu0 0
        %546 = vmatprep.subr.bf16.mxu0 0
        %547 = vmatpush1.bf16.msra.mxu0 0
        %548 = vmatprep.subr.bf16.mxu0 0
        %549 = vmatpush1.bf16.msra.mxu0 0
        %550 = vmatprep.subr.bf16.mxu0 0
        %551 = vmatpush1.bf16.msra.mxu0 0
        %552 = vmatprep.subr.bf16.mxu0 0
        %553 = vmatpush1.bf16.msra.mxu0 0
        %554 = vmatprep.subr.bf16.mxu0 0
        %555 = vmatpush1.bf16.msra.mxu0 0
        %556 = vmatprep.subr.bf16.mxu0 0
        %557 = vmatpush1.bf16.msra.mxu0 0
        %558 = vmatprep.subr.bf16.mxu0 0
        %559 = vmatpush1.bf16.msra.mxu0 0
        %560 = vmatprep.mubr.bf16.mxu0 0
        %561 = vmatmul.mubr.bf16.gmra.mrb[0].mxu0 %v526
        %v562 = vpop.f32.mrb[0].mxu0
        %v563 = vadd.f32 %v511, %v562
        %v564 = vpop.f32.mrb[0].mxu0
        %v565 = vpop.f32.mrb[0].mxu0
        %v566 = vpop.f32.mrb[0].mxu0
        %567 = vdwg.mxu0
        %v568 = vpack.c.bf16 %v563, %v563
        %569 = vst.msk [vmem:[%s417] sm:$0xf] %vm496, %v568
        %v570 = vld [vmem:[%s370] sm:$0xff]
        %v571 = vpack.c.bf16 %v570, %v570
        %s572 = scalar_lea.vmem [#allocation8], 32
        %v573 = vld [vmem:[%s572] sm:$0xf]
        %v574 = vld [vmem:[%s572 + $0x4] sm:$0xf]
        %v575 = vld [vmem:[%s572 + $0x8] sm:$0xf]
        %v576 = vld [vmem:[%s572 + $0xc] sm:$0xf]
        %s577 = scalar_lea.vmem %s4, 2
        %v578 = vld [vmem:[%s577] sm:$0x1]
        %v580 = vlaneseq
        %v581 = vshrl.u32 %v580, 7
        %v582 = vsub.s32 0, %v581
        %v583 = vrot.slane %v578, %v582
        %v589 = vunpack.c.l.b16 %v573
        %v590 = vunpack.c.l.b16 %v574
        %v591 = vunpack.c.l.b16 %v575
        %v592 = vunpack.c.l.b16 %v576
        %v593 = vpack.c.b16 %v590, %v589
        %v594 = vpack.c.b16 %v592, %v591
        %v598 = vsel %vm451, %v571, 0
        %600 = vmatprep.subr.bf16.mxu0 0
        %601 = vmatpush1.bf16.msra.mxu0 %v593
        %602 = vmatprep.subr.bf16.mxu0 0
        %603 = vmatpush1.bf16.msra.mxu0 %v594
        %604 = vmatprep.subr.bf16.mxu0 0
        %605 = vmatpush1.bf16.msra.mxu0 0
        %606 = vmatprep.subr.bf16.mxu0 0
        %607 = vmatpush1.bf16.msra.mxu0 0
        %608 = vmatprep.subr.bf16.mxu0 0
        %609 = vmatpush1.bf16.msra.mxu0 0
        %610 = vmatprep.subr.bf16.mxu0 0
        %611 = vmatpush1.bf16.msra.mxu0 0
        %612 = vmatprep.subr.bf16.mxu0 0
        %613 = vmatpush1.bf16.msra.mxu0 0
        %614 = vmatprep.subr.bf16.mxu0 0
        %615 = vmatpush1.bf16.msra.mxu0 0
        %616 = vmatprep.subr.bf16.mxu0 0
        %617 = vmatpush1.bf16.msra.mxu0 0
        %618 = vmatprep.subr.bf16.mxu0 0
        %619 = vmatpush1.bf16.msra.mxu0 0
        %620 = vmatprep.subr.bf16.mxu0 0
        %621 = vmatpush1.bf16.msra.mxu0 0
        %622 = vmatprep.subr.bf16.mxu0 0
        %623 = vmatpush1.bf16.msra.mxu0 0
        %624 = vmatprep.subr.bf16.mxu0 0
        %625 = vmatpush1.bf16.msra.mxu0 0
        %626 = vmatprep.subr.bf16.mxu0 0
        %627 = vmatpush1.bf16.msra.mxu0 0
        %628 = vmatprep.subr.bf16.mxu0 0
        %629 = vmatpush1.bf16.msra.mxu0 0
        %630 = vmatprep.subr.bf16.mxu0 0
        %631 = vmatpush1.bf16.msra.mxu0 0
        %632 = vmatprep.mubr.bf16.mxu0 0
        %633 = vmatmul.mubr.bf16.gmra.mrb[0].mxu0 %v598
        %v634 = vpop.f32.mrb[0].mxu0
        %v635 = vadd.f32 %v583, %v634
        %v636 = vpop.f32.mrb[0].mxu0
        %v637 = vpop.f32.mrb[0].mxu0
        %v638 = vpop.f32.mrb[0].mxu0
        %639 = vdwg.mxu0
        %v640 = vpack.c.bf16 %v635, %v635
        %641 = vst.msk [vmem:[%s424] sm:$0xf] %vm496, %v640
        %s642 = sand.u32 %s180, 1
        %s643 = scalar_lea.sflag [#allocation4], %s642
        %s644 = sand.u32 %s180, 1
        %s645 = smul.addr %s644, 4
        %s646 = scalar_lea.vmem [#allocation10], %s645
        %s647 = sand.u32 %s32, 1
        %s648 = scalar_lea.sflag [#allocation12], %s647
        %s649 = sand.u32 %s208, 1
        %s650 = smul.addr %s649, 4
        %s651 = scalar_lea.vmem [#allocation11], %s650
        %s652 = sand.u32 %s32, 1
        %s653 = scalar_lea.sflag [#allocation12], %s652
        %s654 = sand.u32 %s236, 1
        %s655 = smul.addr %s654, 4
        %s656 = scalar_lea.vmem [#allocation13], %s655
        // Predicated region
        $region57: #{tpu_custom_call.1} parent=39 // pred_check
          %p657 = pneg %p190
        $region58: #{tpu_custom_call.1} parent=39 // pred_check_branch
          %659 = sbr.rel (%p657) target = $region60
        $region59: #{tpu_custom_call.1} parent=39 // pred_region
          %s661 = ssub.s32 64, 64
          %662 = vsyncadd %s643, %s661
          %s663 = sadd.s32 %s37, %s36
          %s664 = smul.addr %s663, 64
          %s665 = scalar_lea.hbm %s5, %s664
          %s667 = sshll.u32 %s646, 4
          %s668 = int_to_ptr.vmem [resolvable:$true] %s667
          %670 = dma.vmem_to_hbm [thread:$0]  %s668, 64, %s665, %s643
        $region60: #{tpu_custom_call.1} parent=39 // pred_fallthru
          _
        // Predicated region
        $region61: #{tpu_custom_call.1} parent=39 // pred_check
          %p671 = pneg %p218
        $region62: #{tpu_custom_call.1} parent=39 // pred_check_branch
          %673 = sbr.rel (%p671) target = $region64
        $region63: #{tpu_custom_call.1} parent=39 // pred_region
          %s675 = ssub.s32 64, 64
          %676 = vsyncadd %s648, %s675
          %s677 = sadd.s32 %s37, %s36
          %s678 = smul.addr %s677, 64
          %s679 = scalar_lea.hbm %s6, %s678
          %s681 = sshll.u32 %s651, 4
          %s682 = int_to_ptr.vmem [resolvable:$true] %s681
          %684 = dma.vmem_to_hbm [thread:$0]  %s682, 64, %s679, %s648
        $region64: #{tpu_custom_call.1} parent=39 // pred_fallthru
          _
        // Predicated region
        $region65: #{tpu_custom_call.1} parent=39 // pred_check
          %p685 = pneg %p246
        $region66: #{tpu_custom_call.1} parent=39 // pred_check_branch
          %687 = sbr.rel (%p685) target = $region68
        $region67: #{tpu_custom_call.1} parent=39 // pred_region
          %s689 = ssub.s32 64, 64
          %690 = vsyncadd %s653, %s689
          %s691 = sadd.s32 %s37, %s36
          %s692 = smul.addr %s691, 64
          %s693 = scalar_lea.hbm %s7, %s692
          %s695 = sshll.u32 %s656, 4
          %s696 = int_to_ptr.vmem [resolvable:$true] %s695
          %698 = dma.vmem_to_hbm [thread:$0]  %s696, 64, %s693, %s653
        $region68: #{tpu_custom_call.1} parent=39 // pred_fallthru
          _
      $region40: #{tpu_custom_call.1} parent=5 // pred_fallthru
        _
      %p699 = scmp.le.s32.totalorder 2, %s27
      // Predicated region
      $region69: #{tpu_custom_call.1} parent=5 // pred_check
        %p700 = pneg %p699
      $region70: #{tpu_custom_call.1} parent=5 // pred_check_branch
        %702 = sbr.rel (%p700) target = $region72
      $region71: #{tpu_custom_call.1} parent=5 // pred_region
        %s703 = ssub.s32 %s27, 2
        // Predicated region
        $region73: #{tpu_custom_call.1} parent=71 // pred_check
          %p704 = pneg %p196
        $region74: #{tpu_custom_call.1} parent=71 // pred_check_branch
          %706 = sbr.rel (%p704) target = $region76
        $region75: #{tpu_custom_call.1} parent=71 // pred_region
          %s707 = sand.u32 %s181, 1
          %s708 = scalar_lea.sflag [#allocation4], %s707
          %s709 = sand.u32 %s181, 1
          %s710 = smul.addr %s709, 4
          %s711 = scalar_lea.vmem [#allocation10], %s710
          %712 = dma.done %s708, 64
        $region76: #{tpu_custom_call.1} parent=71 // pred_fallthru
          _
        // Predicated region
        $region77: #{tpu_custom_call.1} parent=71 // pred_check
          %p713 = pneg %p224
        $region78: #{tpu_custom_call.1} parent=71 // pred_check_branch
          %715 = sbr.rel (%p713) target = $region80
        $region79: #{tpu_custom_call.1} parent=71 // pred_region
          %s716 = sand.u32 %s33, 1
          %s717 = scalar_lea.sflag [#allocation12], %s716
          %s718 = sand.u32 %s209, 1
          %s719 = smul.addr %s718, 4
          %s720 = scalar_lea.vmem [#allocation11], %s719
          %721 = dma.done %s717, 64
        $region80: #{tpu_custom_call.1} parent=71 // pred_fallthru
          _
        // Predicated region
        $region81: #{tpu_custom_call.1} parent=71 // pred_check
          %p722 = pneg %p252
        $region82: #{tpu_custom_call.1} parent=71 // pred_check_branch
          %724 = sbr.rel (%p722) target = $region84
        $region83: #{tpu_custom_call.1} parent=71 // pred_region
          %s725 = sand.u32 %s33, 1
          %s726 = scalar_lea.sflag [#allocation12], %s725
          %s727 = sand.u32 %s237, 1
          %s728 = smul.addr %s727, 4
          %s729 = scalar_lea.vmem [#allocation13], %s728
          %730 = dma.done %s726, 64
        $region84: #{tpu_custom_call.1} parent=71 // pred_fallthru
          _
      $region72: #{tpu_custom_call.1} parent=5 // pred_fallthru
        _
    $region6: #{tpu_custom_call.1} parent=1 // loop_footer
      %s31 = sadd.s32 1, %s27
    $region7: #{tpu_custom_call.1} parent=1 // loop_footer_branch
      %26 = sbr.rel target = $region3
    $region8: #{tpu_custom_call.1} parent=1 // loop_exit
      _
    %731 = vsyncpa [#allocation3], 1
    %s732 = scalar_lea.sflag [#allocation3], 1
    %733 = vsyncpa %s732, 1
    %734 = vsyncpa [#allocation6], 1
    %s735 = scalar_lea.sflag [#allocation6], 1
    %736 = vsyncpa %s735, 1
    %737 = vsyncpa [#allocation9], 1
    %738 = vsyncpa [#allocation4], 1
    %s739 = scalar_lea.sflag [#allocation4], 1
    %740 = vsyncpa %s739, 1
    %741 = vsyncpa [#allocation12], 1
    %s742 = scalar_lea.sflag [#allocation12], 1
    %743 = vsyncpa %s742, 1

</llo_original>
